<compile_context>
chip_gen: v5e
topology: v5e:2x2
jax: 0.10.0
libtpu: 0.0.40
codegen_flags: <defaults>
</compile_context>

<pallas_src>
import functools

import jax
import jax.numpy as jnp
from jax import lax
from jax.experimental import pallas as pl
from jax.experimental.pallas import tpu as pltpu

NUM_FEATURES = 784
NUM_CLASSES = 10


def softmax_regression_kernel(x_ref, w_ref, b_ref, logits_ref, probas_ref):
    # x_ref: (TB, F)   w_ref: (C, F) (PyTorch layout, resident)   b_ref: (1, C)
    x = x_ref[...]
    w = w_ref[...]
    b = b_ref[...]

    # logits = x @ W^T + b.  Contract the feature axis of both operands so the
    # weight never needs a host-side transpose; MXU matmul with f32 accumulation.
    logits = lax.dot_general(
        x, w,
        dimension_numbers=(((1,), (1,)), ((), ())),
        preferred_element_type=jnp.float32,
    ) + b

    # Numerically stable softmax along the class dim (dim=1), like F.softmax.
    m = jnp.max(logits, axis=1, keepdims=True)
    e = jnp.exp(logits - m)
    denom = jnp.sum(e, axis=1, keepdims=True)
    probas = e * pl.reciprocal(denom, approx=True)   # EUP vrcp, ~free

    logits_ref[...] = logits.astype(logits_ref.dtype)
    probas_ref[...] = probas.astype(probas_ref.dtype)


@functools.partial(jax.jit, static_argnames=("block_b", "input_dtype"))
def softmax_regression(x, weight, bias, *, block_b=1024, input_dtype=None):
    """Forward pass of SoftmaxRegression.

    x:      (B, F) float32 (PyTorch Linear input layout)
    weight: (C, F) float32 (PyTorch Linear weight layout — NOT pre-transposed)
    bias:   (C,)   float32
    Returns (logits, probas), both (B, C) float32.

    input_dtype: optionally stream x/weight as a narrower dtype (e.g. jnp.bfloat16)
    to halve HBM traffic on the memory-bound x read; accumulation stays f32.
    """
    B, F_ = x.shape
    C = weight.shape[0]

    if input_dtype is not None:
        x = x.astype(input_dtype)
        weight = weight.astype(input_dtype)
    b2 = bias.astype(jnp.float32).reshape(1, C)

    # Batch tile: full batch if small, otherwise a multiple-of-8 tile that keeps
    # double-buffered x DMAs comfortably inside the default scoped VMEM on all gens.
    TB = B if B <= block_b else block_b
    grid = (pl.cdiv(B, TB),)

    out_shapes = (
        jax.ShapeDtypeStruct((B, C), jnp.float32),  # logits
        jax.ShapeDtypeStruct((B, C), jnp.float32),  # probas
    )

    return pl.pallas_call(
        softmax_regression_kernel,
        out_shape=out_shapes,
        grid_spec=pltpu.PrefetchScalarGridSpec(
            num_scalar_prefetch=0,
            grid=grid,
            in_specs=[
                pl.BlockSpec((TB, F_), lambda i: (i, 0)),   # x: streamed per tile
                pl.BlockSpec((C, F_), lambda i: (0, 0)),    # weight: VMEM-resident
                pl.BlockSpec((1, C), lambda i: (0, 0)),     # bias: VMEM-resident
            ],
            out_specs=[
                pl.BlockSpec((TB, C), lambda i: (i, 0)),
                pl.BlockSpec((TB, C), lambda i: (i, 0)),
            ],
        ),
        compiler_params=pltpu.CompilerParams(
            # Batch tiles are independent -> shard across TensorCores (v7x: 2 TCs).
            dimension_semantics=("parallel",),
        ),
    )(x, weight, b2)


if __name__ == "__main__":
    key = jax.random.PRNGKey(0)
    kx, kw, kb = jax.random.split(key, 3)

    B = 8  # small self-test batch; kernel tiles larger batches automatically
    x = jax.random.normal(kx, (B, NUM_FEATURES), dtype=jnp.float32)

    # --- 1) Random weights: actually exercises the MXU + bias path. ---
    weight = 0.05 * jax.random.normal(kw, (NUM_CLASSES, NUM_FEATURES), dtype=jnp.float32)
    bias = 0.1 * jax.random.normal(kb, (NUM_CLASSES,), dtype=jnp.float32)

    logits, probas = softmax_regression(x, weight, bias)
    logits, probas = jax.block_until_ready((logits, probas))

    ref_logits = x @ weight.T + bias
    ref_probas = jax.nn.softmax(ref_logits, axis=1)
    assert jnp.allclose(logits, ref_logits, atol=1e-3, rtol=1e-3), "logits mismatch"
    # approx=True reciprocal -> allow ~1e-3 relative slack on probabilities
    assert jnp.allclose(probas, ref_probas, atol=2e-3, rtol=2e-3), "probas mismatch"

    # --- 2) Module's actual init (zeroed weight/bias), as in the PyTorch spec. ---
    w0 = jnp.zeros((NUM_CLASSES, NUM_FEATURES), dtype=jnp.float32)
    b0 = jnp.zeros((NUM_CLASSES,), dtype=jnp.float32)
    logits0, probas0 = jax.block_until_ready(softmax_regression(x, w0, b0))
    assert jnp.allclose(logits0, jnp.zeros((B, NUM_CLASSES)), atol=1e-6), "zero-init logits mismatch"
    assert jnp.allclose(probas0, jnp.full((B, NUM_CLASSES), 1.0 / NUM_CLASSES),
                        atol=2e-3), "zero-init probas mismatch"

    print("KERNEL_OK")
</pallas_src>

<mosaic_0001>
module attributes {stable_mosaic.version = 11 : i64} {
  func.func @softmax_regression_kernel(%arg0: i32, %arg1: memref<8x784xf32, #tpu.memory_space<vmem>>, %arg2: memref<10x784xf32, #tpu.memory_space<vmem>>, %arg3: memref<1x10xf32, #tpu.memory_space<vmem>>, %arg4: memref<8x10xf32, #tpu.memory_space<vmem>>, %arg5: memref<8x10xf32, #tpu.memory_space<vmem>>) attributes {dimension_semantics = [#tpu.dimension_semantics<parallel>], iteration_bounds = array<i64: 1>, scalar_prefetch = 0 : i64, scratch_operands = 0 : i64, tpu.core_type = #tpu.core_type<tc>, window_params = [{transform_indices = @transform_0, window_bounds = array<i64: 8, 784>}, {pipeline_mode = #tpu.pipeline_mode<synchronous>, transform_indices = @transform_1, window_bounds = array<i64: 10, 784>}, {pipeline_mode = #tpu.pipeline_mode<synchronous>, transform_indices = @transform_2, window_bounds = array<i64: 1, 10>}, {transform_indices = @transform_3, window_bounds = array<i64: 8, 10>}, {transform_indices = @transform_4, window_bounds = array<i64: 8, 10>}]} {
    %c0 = arith.constant 0 : index
    %c0_0 = arith.constant 0 : index
    %0 = vector.load %arg1[%c0, %c0_0] : memref<8x784xf32, #tpu.memory_space<vmem>>, vector<8x784xf32>
    %c0_1 = arith.constant 0 : index
    %c0_2 = arith.constant 0 : index
    %1 = vector.load %arg2[%c0_1, %c0_2] : memref<10x784xf32, #tpu.memory_space<vmem>>, vector<10x784xf32>
    %c0_3 = arith.constant 0 : index
    %c0_4 = arith.constant 0 : index
    %2 = vector.load %arg3[%c0_3, %c0_4] : memref<1x10xf32, #tpu.memory_space<vmem>>, vector<1x10xf32>
    %cst = arith.constant dense<0.000000e+00> : vector<8x10xf32>
    %3 = tpu.matmul %0, %1, %cst {dimension_numbers = #tpu.dot_dimension_numbers<[1], [1], [0], [0], [0, 0, 1, 0], [], []>} : vector<8x784xf32>, vector<10x784xf32>, vector<8x10xf32> -> vector<8x10xf32>
    %4 = vector.broadcast %2 : vector<1x10xf32> to vector<8x10xf32>
    %5 = arith.addf %3, %4 : vector<8x10xf32>
    %cst_5 = arith.constant dense<0xFF800000> : vector<8xf32>
    %6 = vector.multi_reduction <maximumf>, %5, %cst_5 [1] : vector<8x10xf32> to vector<8xf32>
    %7 = vector.shape_cast %6 : vector<8xf32> to vector<8x1xf32>
    %8 = vector.broadcast %7 : vector<8x1xf32> to vector<8x10xf32>
    %9 = arith.subf %5, %8 : vector<8x10xf32>
    %10 = math.exp %9 : vector<8x10xf32>
    %cst_6 = arith.constant dense<0.000000e+00> : vector<8xf32>
    %11 = vector.multi_reduction <add>, %10, %cst_6 [1] : vector<8x10xf32> to vector<8xf32>
    %12 = vector.shape_cast %11 : vector<8xf32> to vector<8x1xf32>
    %13 = tpu.reciprocal %12 {approx = true} : vector<8x1xf32> -> vector<8x1xf32>
    %14 = vector.broadcast %13 : vector<8x1xf32> to vector<8x10xf32>
    %15 = arith.mulf %10, %14 : vector<8x10xf32>
    %c0_7 = arith.constant 0 : index
    %c0_8 = arith.constant 0 : index
    %16 = vector.load %arg4[%c0_7, %c0_8] : memref<8x10xf32, #tpu.memory_space<vmem>>, vector<8x10xf32>
    tpu.vector_store %arg4[%c0_7, %c0_8], %5 {strides = array<i32>} : memref<8x10xf32, #tpu.memory_space<vmem>>, vector<8x10xf32>,
    %c0_9 = arith.constant 0 : index
    %c0_10 = arith.constant 0 : index
    %17 = vector.load %arg5[%c0_9, %c0_10] : memref<8x10xf32, #tpu.memory_space<vmem>>, vector<8x10xf32>
    tpu.vector_store %arg5[%c0_9, %c0_10], %15 {strides = array<i32>} : memref<8x10xf32, #tpu.memory_space<vmem>>, vector<8x10xf32>,
    return
  }
  func.func @transform_0(%arg0: i32) -> (i32, i32) {
    %c0_i32 = arith.constant 0 : i32
    %c0_i32_0 = arith.constant 0 : i32
    return %arg0, %c0_i32 : i32, i32
  }
  func.func @transform_1(%arg0: i32) -> (i32, i32) {
    %c0_i32 = arith.constant 0 : i32
    %c0_i32_0 = arith.constant 0 : i32
    %c0_i32_1 = arith.constant 0 : i32
    return %c0_i32, %c0_i32_0 : i32, i32
  }
  func.func @transform_2(%arg0: i32) -> (i32, i32) {
    %c0_i32 = arith.constant 0 : i32
    %c0_i32_0 = arith.constant 0 : i32
    %c0_i32_1 = arith.constant 0 : i32
    return %c0_i32, %c0_i32_0 : i32, i32
  }
  func.func @transform_3(%arg0: i32) -> (i32, i32) {
    %c0_i32 = arith.constant 0 : i32
    %c0_i32_0 = arith.constant 0 : i32
    return %arg0, %c0_i32 : i32, i32
  }
  func.func @transform_4(%arg0: i32) -> (i32, i32) {
    %c0_i32 = arith.constant 0 : i32
    %c0_i32_0 = arith.constant 0 : i32
    return %arg0, %c0_i32 : i32, i32
  }
}

</mosaic_0001>

<llo_original>
// kernel: softmax_regression.1
$region0: #{softmax_regression.1}
  #allocation0 [shape = 'u32[]', space=smem, size = 0x4, offset = 0x4, fixed_abs, tag = 'smem constant byte address 0x4 - core index']
  #allocation1 [shape = 'u32[72,128]{1,0:T(1,128)}', space=vmem, size = 0x9000, scoped, tag = 'internal scratch']
  %s0 = inlined_call_operand.hbm [shape: f32[8,784], index: 0, kind: input, shape index: {}]
  %s1 = inlined_call_operand.hbm [shape: f32[10,784], index: 1, kind: input, shape index: {}]
  %s2 = inlined_call_operand.vmem [shape: f32[1,10], index: 2, kind: input, shape index: {}]
  %s3 = inlined_call_operand.hbm [shape: f32[8,10], index: 3, kind: output, shape index: {0}]
  %s4 = inlined_call_operand.hbm [shape: f32[8,10], index: 4, kind: output, shape index: {1}]
  %5 = xla_tuple %s3, %s4
  %s6 = sld [smem:[#allocation0]]
  $region38: #{softmax_regression.1} parent=0
    _
  %s8 = ssub.s32 1, %s6
  %s9 = scalar_select 0, %s8, %s6
  $region1: #{softmax_regression.1} parent=0
    #allocation2 [shape = 'u8[28672]{0}', space=vmem, size = 0x7000, scoped, tag = 'input window, operand 0, single buffered']
    #allocation3 [shape = 's32[1]{0}', space=sflag, size = 0x4, scoped, tag = 'scoped memory for softmax_regression.1']
    #allocation4 [shape = 's32[1]{0}', space=sflag, size = 0x4, scoped, tag = 'scoped memory for softmax_regression.1']
    #allocation5 [shape = 'u8[57344]{0}', space=vmem, size = 0xe000, scoped, tag = 'input window, operand 1, single buffered']
    #allocation6 [shape = 's32[1]{0}', space=sflag, size = 0x4, scoped, tag = 'scoped memory for softmax_regression.1']
    #allocation7 [shape = 'u8[4096]{0}', space=vmem, size = 0x1000, scoped, tag = 'output window, operand 0, single buffered']
    #allocation8 [shape = 'u8[4096]{0}', space=vmem, size = 0x1000, scoped, tag = 'output window, operand 1, single buffered']
    #allocation9 [shape = 's32[1]{0}', space=sflag, size = 0x4, scoped, tag = 'scoped memory for softmax_regression.1']
    %10 = vsyncpa [#allocation3], 0
    %11 = vsyncpa [#allocation6], 0
    %12 = vsyncpa [#allocation4], 0
    %13 = vsyncpa [#allocation9], 0
    // Predicated region
    $region2: #{softmax_regression.1} parent=1 // pred_check
      _
    $region3: #{softmax_regression.1} parent=1 // pred_check_branch
      %15 = sbr.rel (0) target = $region5
    $region4: #{softmax_regression.1} parent=1 // pred_region
      %17 = vsyncadd [#allocation3], 0
      %s19 = sshll.u32 %s0, 4
      %s20 = int_to_ptr.hbm [resolvable:$true] %s19
      %s21 = sshll.u32 [#allocation2], 4
      %s22 = int_to_ptr.vmem [resolvable:$true] %s21
      %24 = dma.hbm_to_vmem [thread:$0]  %s20, 896, %s22, [#allocation3]
    $region5: #{softmax_regression.1} parent=1 // pred_fallthru
      _
    // Predicated region
    $region6: #{softmax_regression.1} parent=1 // pred_check
      _
    $region7: #{softmax_regression.1} parent=1 // pred_check_branch
      %26 = sbr.rel (0) target = $region9
    $region8: #{softmax_regression.1} parent=1 // pred_region
      %28 = vsyncadd [#allocation6], 0
      %s29 = sshll.u32 %s1, 4
      %s30 = int_to_ptr.hbm [resolvable:$true] %s29
      %s31 = sshll.u32 [#allocation5], 4
      %s32 = int_to_ptr.vmem [resolvable:$true] %s31
      %37 = dma.hbm_to_vmem [thread:$0]  %s30, 1792, %s32, [#allocation6], 896, 896, 56
    $region9: #{softmax_regression.1} parent=1 // pred_fallthru
      _
    // Predicated region
    $region10: #{softmax_regression.1} parent=1 // pred_check
      _
    $region11: #{softmax_regression.1} parent=1 // pred_check_branch
      %39 = sbr.rel (0) target = $region13
    $region12: #{softmax_regression.1} parent=1 // pred_region
      _
    $region13: #{softmax_regression.1} parent=1 // pred_fallthru
      _
    // Predicated region
    $region14: #{softmax_regression.1} parent=1 // pred_check
      _
    $region15: #{softmax_regression.1} parent=1 // pred_check_branch
      %41 = sbr.rel (0) target = $region17
    $region16: #{softmax_regression.1} parent=1 // pred_region
      %43 = dma.done [#allocation3], 896
    $region17: #{softmax_regression.1} parent=1 // pred_fallthru
      _
    // Predicated region
    $region18: #{softmax_regression.1} parent=1 // pred_check
      _
    $region19: #{softmax_regression.1} parent=1 // pred_check_branch
      %45 = sbr.rel (0) target = $region21
    $region20: #{softmax_regression.1} parent=1 // pred_region
      %47 = dma.done [#allocation6], 1792
    $region21: #{softmax_regression.1} parent=1 // pred_fallthru
      _
    %v48 = vld [vmem:[#allocation2] sm:$0xff]
    %v49 = vld [vmem:[#allocation2 + $0x8] sm:$0xff]
    %v50 = vld [vmem:[#allocation2 + $0x10] sm:$0xff]
    %v51 = vld [vmem:[#allocation2 + $0x18] sm:$0xff]
    %v52 = vld [vmem:[#allocation2 + $0x20] sm:$0xff]
    %v53 = vld [vmem:[#allocation2 + $0x28] sm:$0xff]
    %v54 = vld [vmem:[#allocation2 + $0x30] sm:$0xff]
    %v55 = vld [vmem:[#allocation5] sm:$0xff]
    %v56 = vld [vmem:[#allocation5 + $0x8] sm:$0xff]
    %v57 = vld [vmem:[#allocation5 + $0x10] sm:$0xff]
    %v58 = vld [vmem:[#allocation5 + $0x18] sm:$0xff]
    %v59 = vld [vmem:[#allocation5 + $0x20] sm:$0xff]
    %v60 = vld [vmem:[#allocation5 + $0x28] sm:$0xff]
    %v61 = vld [vmem:[#allocation5 + $0x30] sm:$0xff]
    %v62 = vld [vmem:[#allocation5 + $0x38] sm:$0x3]
    %v63 = vld [vmem:[#allocation5 + $0x40] sm:$0x3]
    %v64 = vld [vmem:[#allocation5 + $0x48] sm:$0x3]
    %v65 = vld [vmem:[#allocation5 + $0x50] sm:$0x3]
    %v66 = vld [vmem:[#allocation5 + $0x58] sm:$0x3]
    %v67 = vld [vmem:[#allocation5 + $0x60] sm:$0x3]
    %v68 = vld [vmem:[#allocation5 + $0x68] sm:$0x3]
    %v69 = vld [vmem:[%s2] sm:$0x1]
    %v71 = vperm.slane %v69, 0
    %vm73 = vcmask 130048
    %v75 = vsel %vm73, %v54, 0
    %v78 = vsel %vm73, %v61, 0
    %v81 = vsel %vm73, %v68, 0
    %83 = vmatpush.xpose.msra.mxu0 0.0
    %84 = vmatpush.xpose.msra.mxu0 0.0
    %85 = vmatpush.xpose.msra.mxu0 0.0
    %86 = vmatpush.xpose.msra.mxu0 0.0
    %87 = vmatpush.xpose.msra.mxu0 0.0
    %88 = vmatpush.xpose.msra.mxu0 0.0
    %89 = vmatpush.xpose.msra.mxu0 0.0
    %90 = vmatpush.xpose.msra.mxu0 0.0
    %91 = vmatpush.xpose.msra.mxu0 0.0
    %92 = vmatpush.xpose.msra.mxu0 0.0
    %93 = vmatpush.xpose.msra.mxu0 0.0
    %94 = vmatpush.xpose.msra.mxu0 0.0
    %95 = vmatpush.xpose.msra.mxu0 0.0
    %96 = vmatpush.xpose.msra.mxu0 0.0
    %97 = vmatpush.xpose.msra.mxu0 %v62
    %98 = vmatpush.xpose.msra.mxu0 %v55
    %99 = vmatmul.f32.gmra.mxu0 %v48
    %v100 = vpop.f32.mrf.mxu0
    %v101 = vadd.f32 %v71, %v100
    %102 = vdwg.mxu0
    %103 = vmatpush.xpose.msra.mxu0 0.0
    %104 = vmatpush.xpose.msra.mxu0 0.0
    %105 = vmatpush.xpose.msra.mxu0 0.0
    %106 = vmatpush.xpose.msra.mxu0 0.0
    %107 = vmatpush.xpose.msra.mxu0 0.0
    %108 = vmatpush.xpose.msra.mxu0 0.0
    %109 = vmatpush.xpose.msra.mxu0 0.0
    %110 = vmatpush.xpose.msra.mxu0 0.0
    %111 = vmatpush.xpose.msra.mxu0 0.0
    %112 = vmatpush.xpose.msra.mxu0 0.0
    %113 = vmatpush.xpose.msra.mxu0 0.0
    %114 = vmatpush.xpose.msra.mxu0 0.0
    %115 = vmatpush.xpose.msra.mxu0 0.0
    %116 = vmatpush.xpose.msra.mxu0 0.0
    %117 = vmatpush.xpose.msra.mxu0 %v63
    %118 = vmatpush.xpose.msra.mxu0 %v56
    %119 = vmatmul.f32.gmra.mxu0 %v49
    %v120 = vpop.f32.mrf.mxu0
    %v121 = vadd.f32 %v101, %v120
    %122 = vdwg.mxu0
    %123 = vmatpush.xpose.msra.mxu0 0.0
    %124 = vmatpush.xpose.msra.mxu0 0.0
    %125 = vmatpush.xpose.msra.mxu0 0.0
    %126 = vmatpush.xpose.msra.mxu0 0.0
    %127 = vmatpush.xpose.msra.mxu0 0.0
    %128 = vmatpush.xpose.msra.mxu0 0.0
    %129 = vmatpush.xpose.msra.mxu0 0.0
    %130 = vmatpush.xpose.msra.mxu0 0.0
    %131 = vmatpush.xpose.msra.mxu0 0.0
    %132 = vmatpush.xpose.msra.mxu0 0.0
    %133 = vmatpush.xpose.msra.mxu0 0.0
    %134 = vmatpush.xpose.msra.mxu0 0.0
    %135 = vmatpush.xpose.msra.mxu0 0.0
    %136 = vmatpush.xpose.msra.mxu0 0.0
    %137 = vmatpush.xpose.msra.mxu0 %v64
    %138 = vmatpush.xpose.msra.mxu0 %v57
    %139 = vmatmul.f32.gmra.mxu0 %v50
    %v140 = vpop.f32.mrf.mxu0
    %v141 = vadd.f32 %v121, %v140
    %142 = vdwg.mxu0
    %143 = vmatpush.xpose.msra.mxu0 0.0
    %144 = vmatpush.xpose.msra.mxu0 0.0
    %145 = vmatpush.xpose.msra.mxu0 0.0
    %146 = vmatpush.xpose.msra.mxu0 0.0
    %147 = vmatpush.xpose.msra.mxu0 0.0
    %148 = vmatpush.xpose.msra.mxu0 0.0
    %149 = vmatpush.xpose.msra.mxu0 0.0
    %150 = vmatpush.xpose.msra.mxu0 0.0
    %151 = vmatpush.xpose.msra.mxu0 0.0
    %152 = vmatpush.xpose.msra.mxu0 0.0
    %153 = vmatpush.xpose.msra.mxu0 0.0
    %154 = vmatpush.xpose.msra.mxu0 0.0
    %155 = vmatpush.xpose.msra.mxu0 0.0
    %156 = vmatpush.xpose.msra.mxu0 0.0
    %157 = vmatpush.xpose.msra.mxu0 %v65
    %158 = vmatpush.xpose.msra.mxu0 %v58
    %159 = vmatmul.f32.gmra.mxu0 %v51
    %v160 = vpop.f32.mrf.mxu0
    %v161 = vadd.f32 %v141, %v160
    %162 = vdwg.mxu0
    %163 = vmatpush.xpose.msra.mxu0 0.0
    %164 = vmatpush.xpose.msra.mxu0 0.0
    %165 = vmatpush.xpose.msra.mxu0 0.0
    %166 = vmatpush.xpose.msra.mxu0 0.0
    %167 = vmatpush.xpose.msra.mxu0 0.0
    %168 = vmatpush.xpose.msra.mxu0 0.0
    %169 = vmatpush.xpose.msra.mxu0 0.0
    %170 = vmatpush.xpose.msra.mxu0 0.0
    %171 = vmatpush.xpose.msra.mxu0 0.0
    %172 = vmatpush.xpose.msra.mxu0 0.0
    %173 = vmatpush.xpose.msra.mxu0 0.0
    %174 = vmatpush.xpose.msra.mxu0 0.0
    %175 = vmatpush.xpose.msra.mxu0 0.0
    %176 = vmatpush.xpose.msra.mxu0 0.0
    %177 = vmatpush.xpose.msra.mxu0 %v66
    %178 = vmatpush.xpose.msra.mxu0 %v59
    %179 = vmatmul.f32.gmra.mxu0 %v52
    %v180 = vpop.f32.mrf.mxu0
    %v181 = vadd.f32 %v161, %v180
    %182 = vdwg.mxu0
    %183 = vmatpush.xpose.msra.mxu0 0.0
    %184 = vmatpush.xpose.msra.mxu0 0.0
    %185 = vmatpush.xpose.msra.mxu0 0.0
    %186 = vmatpush.xpose.msra.mxu0 0.0
    %187 = vmatpush.xpose.msra.mxu0 0.0
    %188 = vmatpush.xpose.msra.mxu0 0.0
    %189 = vmatpush.xpose.msra.mxu0 0.0
    %190 = vmatpush.xpose.msra.mxu0 0.0
    %191 = vmatpush.xpose.msra.mxu0 0.0
    %192 = vmatpush.xpose.msra.mxu0 0.0
    %193 = vmatpush.xpose.msra.mxu0 0.0
    %194 = vmatpush.xpose.msra.mxu0 0.0
    %195 = vmatpush.xpose.msra.mxu0 0.0
    %196 = vmatpush.xpose.msra.mxu0 0.0
    %197 = vmatpush.xpose.msra.mxu0 %v67
    %198 = vmatpush.xpose.msra.mxu0 %v60
    %199 = vmatmul.f32.gmra.mxu0 %v53
    %v200 = vpop.f32.mrf.mxu0
    %v201 = vadd.f32 %v181, %v200
    %202 = vdwg.mxu0
    %203 = vmatpush.xpose.msra.mxu0 0.0
    %204 = vmatpush.xpose.msra.mxu0 0.0
    %205 = vmatpush.xpose.msra.mxu0 0.0
    %206 = vmatpush.xpose.msra.mxu0 0.0
    %207 = vmatpush.xpose.msra.mxu0 0.0
    %208 = vmatpush.xpose.msra.mxu0 0.0
    %209 = vmatpush.xpose.msra.mxu0 0.0
    %210 = vmatpush.xpose.msra.mxu0 0.0
    %211 = vmatpush.xpose.msra.mxu0 0.0
    %212 = vmatpush.xpose.msra.mxu0 0.0
    %213 = vmatpush.xpose.msra.mxu0 0.0
    %214 = vmatpush.xpose.msra.mxu0 0.0
    %215 = vmatpush.xpose.msra.mxu0 0.0
    %216 = vmatpush.xpose.msra.mxu0 0.0
    %217 = vmatpush.xpose.msra.mxu0 %v81
    %218 = vmatpush.xpose.msra.mxu0 %v78
    %219 = vmatmul.f32.gmra.mxu0 %v75
    %v220 = vpop.f32.mrf.mxu0
    %v221 = vadd.f32 %v201, %v220
    %222 = vdwg.mxu0
    %vm223 = vcmask 80896
    %v224 = vsel %vm223, %v221, -inf
    %225 = vmax.xlane.f32.xlu0 %v224
    %v226 = vpop.xlane.xlu0 %225
    %v227 = vsub.f32 %v221, %v226
    %v228 = vmul.f32 %v227, 1.442695
    %v229 = vpow.pop %v228
    %v230 = vsel %vm223, %v229, 0.0
    %231 = vadd.xlane.f32.xlu0 %v230
    %v232 = vpop.xlane.xlu0 %231
    %v233 = vrcp.pop %v232
    %v234 = vmul.f32 %v229, %v233
    %235 = vst.msk [vmem:[#allocation7] sm:$0xff] %vm223, %v221
    %236 = vst.msk [vmem:[#allocation8] sm:$0xff] %vm223, %v234
    // Predicated region
    $region22: #{softmax_regression.1} parent=1 // pred_check
      _
    $region23: #{softmax_regression.1} parent=1 // pred_check_branch
      %238 = sbr.rel (0) target = $region25
    $region24: #{softmax_regression.1} parent=1 // pred_region
      %240 = vsyncadd [#allocation4], 0
      %s242 = sshll.u32 [#allocation7], 4
      %s243 = int_to_ptr.vmem [resolvable:$true] %s242
      %s244 = sshll.u32 %s3, 4
      %s245 = int_to_ptr.hbm [resolvable:$true] %s244
      %247 = dma.vmem_to_hbm [thread:$0]  %s243, 128, %s245, [#allocation4]
    $region25: #{softmax_regression.1} parent=1 // pred_fallthru
      _
    // Predicated region
    $region26: #{softmax_regression.1} parent=1 // pred_check
      _
    $region27: #{softmax_regression.1} parent=1 // pred_check_branch
      %249 = sbr.rel (0) target = $region29
    $region28: #{softmax_regression.1} parent=1 // pred_region
      %251 = vsyncadd [#allocation9], 0
      %s253 = sshll.u32 [#allocation8], 4
      %s254 = int_to_ptr.vmem [resolvable:$true] %s253
      %s255 = sshll.u32 %s4, 4
      %s256 = int_to_ptr.hbm [resolvable:$true] %s255
      %258 = dma.vmem_to_hbm [thread:$0]  %s254, 128, %s256, [#allocation9]
    $region29: #{softmax_regression.1} parent=1 // pred_fallthru
      _
    // Predicated region
    $region30: #{softmax_regression.1} parent=1 // pred_check
      _
    $region31: #{softmax_regression.1} parent=1 // pred_check_branch
      %260 = sbr.rel (0) target = $region33
    $region32: #{softmax_regression.1} parent=1 // pred_region
      %262 = dma.done [#allocation4], 128
    $region33: #{softmax_regression.1} parent=1 // pred_fallthru
      _
    // Predicated region
    $region34: #{softmax_regression.1} parent=1 // pred_check
      _
    $region35: #{softmax_regression.1} parent=1 // pred_check_branch
      %264 = sbr.rel (0) target = $region37
    $region36: #{softmax_regression.1} parent=1 // pred_region
      %266 = dma.done [#allocation9], 128
    $region37: #{softmax_regression.1} parent=1 // pred_fallthru
      _
    %267 = vsyncpa [#allocation3], 1
    %268 = vsyncpa [#allocation6], 1
    %269 = vsyncpa [#allocation4], 1
    %270 = vsyncpa [#allocation9], 1

</llo_original>
